<compile_context>
chip_gen: v7x
topology: tpu7x:2x2x1
jax: 0.10.0
libtpu: 0.0.40
codegen_flags: <defaults>
</compile_context>

<pallas_src>
import numpy as np

import jax
import jax.numpy as jnp
from jax.experimental import pallas as pl
from jax.experimental.pallas import tpu as pltpu


def _cdiv(a, b):
    return -(-a // b)


def _round_up(a, b):
    return _cdiv(a, b) * b


def conv_tokenizer_kernel(x_ref, w_ref, b_ref, o_ref):
    # x_ref: (tm, C)  f32  im2col columns; column c = k*D + d holds x[t+k-1, d]
    # w_ref: (C, E)   f32  weight row c = weight[:, d, k]^T
    # b_ref: (1, E)   f32  bias
    # o_ref: (tm, E)       output rows (lane-dense for E a multiple of 128)
    #
    # D is tiny (module default 2), so this is not a matmul-shaped problem: C unrolled
    # VPU FMAs in exact f32 beat the MXU (which would be push-bound at ~1-2% depth
    # utilization) and keep the math bit-exact f32.
    xc = x_ref[...].astype(jnp.float32)          # (tm, C)
    w = w_ref[...]                               # (C, E)
    ncols = xc.shape[1]

    acc = xc[:, 0:1] * w[0:1, :] + b_ref[...]    # (tm, E) f32
    for c in range(1, ncols):                    # static unroll (C = 3*D, e.g. 6)
        acc = acc + xc[:, c:c + 1] * w[c:c + 1, :]

    o_ref[...] = acc.astype(o_ref.dtype)


def conv_tokenizer(x, weight, bias, *, rows_per_block=8192, out_dtype=None):
    """x: (B, A, T, D); weight: (E, D, 3) (PyTorch Conv1d layout); bias: (E,).

    out_dtype=jnp.bfloat16 halves the dominant (output) HBM traffic; default keeps the
    input dtype for exact-f32 results.
    """
    B, A, T, D = x.shape
    E = weight.shape[0]
    N = B * A
    M = N * T
    C = 3 * D
    out_dtype = x.dtype if out_dtype is None else jnp.dtype(out_dtype)
    out_isz = jnp.dtype(out_dtype).itemsize

    # --- glue (input side is tiny): per-sequence zero padding on T (no cross-sequence
    # leakage) and a 3*D-column im2col.  24 B/row extra HBM traffic at D=2 vs the
    # >=256 B/row output write; in exchange the kernel needs no in-kernel relayout.
    xs = x.reshape(N, T, D)
    xp = jnp.pad(xs, ((0, 0), (1, 1), (0, 0)))                      # (N, T+2, D)
    xcol = jnp.concatenate(
        [xp[:, 0:T, :], xp[:, 1:T + 1, :], xp[:, 2:T + 2, :]], axis=-1
    )                                                               # (N, T, 3D)
    xcol = xcol.reshape(M, C).astype(jnp.float32)

    # PyTorch Conv1d: out[n,e,t] = bias[e] + sum_{d,k} weight[e,d,k] * x[n, t+k-1, d]
    # -> W[k*D+d, e] = weight[e, d, k]
    Wk = jnp.transpose(weight, (2, 1, 0)).reshape(C, E).astype(jnp.float32)
    b2 = bias.reshape(1, E).astype(jnp.float32)

    # --- tile selection (rows of the flattened B*A*T axis per grid step)
    lane = 128
    M8 = _round_up(M, 8)
    # Double-buffered VMEM footprint per row: input block is lane-padded C -> 128.
    bytes_per_row = 2 * lane * 4 + 2 * _round_up(E, lane) * out_isz
    tm_cap = max(8, ((40 << 20) // bytes_per_row) // 8 * 8)          # ~40 MiB budget
    tm = max(8, (min(rows_per_block, tm_cap, M8) // 8) * 8)          # never pad tiny M up
    nb = _cdiv(M8, tm)
    if nb == 1 and M8 >= 16:
        nb = 2                      # >=2 steps: pipeline overlap + both v7x TCs busy
    if nb > 1 and nb % 2 == 1:
        nb += 1                     # even grid so the two v7x TCs get equal work
    tm = _round_up(_cdiv(M8, nb), 8)
    M_pad = nb * tm
    if M_pad != M:
        xcol = jnp.pad(xcol, ((0, M_pad - M), (0, 0)))

    # Explicit VMEM limit so large rows_per_block never trips the scoped defaults
    # (16 MiB on v5e, 32 MiB on v6e/v7x); actual use stays far below 64 MiB physical.
    in_blk = tm * lane * 4
    out_blk = tm * _round_up(E, lane) * out_isz
    w_blk = _round_up(C, 8) * _round_up(E, lane) * 4
    b_blk = 8 * _round_up(E, lane) * 4
    vmem_needed = 2 * (in_blk + out_blk + w_blk + b_blk) + (2 << 20)
    vmem_limit = int(min(64 << 20, max(16 << 20, vmem_needed)))

    cost = pl.CostEstimate(
        flops=2 * M * C * E,
        transcendentals=0,
        bytes_accessed=int(xcol.size * 4 + Wk.size * 4 + b2.size * 4 + M * E * out_isz),
    )

    out = pl.pallas_call(
        conv_tokenizer_kernel,
        out_shape=jax.ShapeDtypeStruct((M_pad, E), out_dtype),
        grid_spec=pltpu.PrefetchScalarGridSpec(
            num_scalar_prefetch=0,
            grid=(nb,),
            in_specs=[
                # im2col rows; contiguous HBM, full (last-dim) block -> no 64x-padded
                # 3-D halo block.  (Add pipeline_mode=pl.Buffered(3) here if the
                # input DMA ever shows up as exposed latency.)
                pl.BlockSpec((tm, C), lambda i: (i, 0)),
                pl.BlockSpec((C, E), lambda i: (0, 0)),             # weights, resident
                pl.BlockSpec((1, E), lambda i: (0, 0)),             # bias, resident
            ],
            out_specs=pl.BlockSpec((tm, E), lambda i: (i, 0)),      # lane-dense (E>=128)
        ),
        compiler_params=pltpu.CompilerParams(
            dimension_semantics=("parallel",),
            vmem_limit_bytes=vmem_limit,
        ),
        cost_estimate=cost,
    )(xcol, Wk, b2)

    return out[:M].reshape(B, A, T, E)


def conv_tokenizer_ref(x, weight, bias):
    """Pure-JAX reference matching the PyTorch forward exactly."""
    B, A, T, D = x.shape
    xf = jnp.transpose(x.reshape(B * A, T, D), (0, 2, 1))            # (N, D, T)
    out = jax.lax.conv_general_dilated(
        xf, weight, window_strides=(1,), padding=((1, 1),),
        dimension_numbers=("NCH", "OIH", "NCH"),
    )
    out = out + bias[None, :, None]
    return jnp.transpose(out, (0, 2, 1)).reshape(B, A, T, -1)


def _run_case(B, A, T, D, E, seed=0, out_dtype=None, rtol=1e-5, atol=1e-5):
    key = jax.random.PRNGKey(seed)
    kx, kw, kb = jax.random.split(key, 3)
    x = jax.random.normal(kx, (B, A, T, D), dtype=jnp.float32)
    weight = jax.random.normal(kw, (E, D, 3), dtype=jnp.float32) * 0.1
    bias = jax.random.normal(kb, (E,), dtype=jnp.float32) * 0.1

    out = jax.block_until_ready(conv_tokenizer(x, weight, bias, out_dtype=out_dtype))
    ref = jax.block_until_ready(conv_tokenizer_ref(x, weight, bias))
    assert out.shape == (B, A, T, E), out.shape
    np.testing.assert_allclose(
        np.asarray(out.astype(jnp.float32)), np.asarray(ref), rtol=rtol, atol=atol)


if __name__ == "__main__":
    # Module defaults: input_dim (D) = 2, emb_dim (E) = 128 -> lane-dense output.
    _run_case(B=2, A=4, T=16, D=2, E=128, seed=0)
    # Row count not a power of two exercises the rebalanced / padded grid path.
    _run_case(B=3, A=3, T=16, D=2, E=128, seed=1)
    # bf16 output option (recommended for throughput): only the final cast changes.
    _run_case(B=2, A=4, T=16, D=2, E=128, seed=2,
              out_dtype=jnp.bfloat16, rtol=2e-2, atol=2e-2)
    print("KERNEL_OK")
</pallas_src>

<mosaic_0001>
module attributes {stable_mosaic.version = 11 : i64} {
  func.func @conv_tokenizer_kernel(%arg0: i32, %arg1: memref<64x6xf32, #tpu.memory_space<vmem>>, %arg2: memref<6x128xf32, #tpu.memory_space<vmem>>, %arg3: memref<1x128xf32, #tpu.memory_space<vmem>>, %arg4: memref<64x128xf32, #tpu.memory_space<vmem>>) attributes {dimension_semantics = [#tpu.dimension_semantics<parallel>], iteration_bounds = array<i64: 2>, scalar_prefetch = 0 : i64, scratch_operands = 0 : i64, tpu.core_type = #tpu.core_type<tc>, window_params = [{transform_indices = @transform_0, window_bounds = array<i64: 64, 6>}, {pipeline_mode = #tpu.pipeline_mode<synchronous>, transform_indices = @transform_1, window_bounds = array<i64: 6, 128>}, {pipeline_mode = #tpu.pipeline_mode<synchronous>, transform_indices = @transform_2, window_bounds = array<i64: 1, 128>}, {transform_indices = @transform_3, window_bounds = array<i64: 64, 128>}]} {
    %c0 = arith.constant 0 : index
    %c0_0 = arith.constant 0 : index
    %0 = vector.load %arg1[%c0, %c0_0] : memref<64x6xf32, #tpu.memory_space<vmem>>, vector<64x6xf32>
    %c0_1 = arith.constant 0 : index
    %c0_2 = arith.constant 0 : index
    %1 = vector.load %arg2[%c0_1, %c0_2] : memref<6x128xf32, #tpu.memory_space<vmem>>, vector<6x128xf32>
    %2 = vector.extract_strided_slice %0 {offsets = [0, 0], sizes = [64, 1], strides = [1, 1]} : vector<64x6xf32> to vector<64x1xf32>
    %3 = vector.extract_strided_slice %1 {offsets = [0, 0], sizes = [1, 128], strides = [1, 1]} : vector<6x128xf32> to vector<1x128xf32>
    %4 = vector.broadcast %2 : vector<64x1xf32> to vector<64x128xf32>
    %5 = vector.broadcast %3 : vector<1x128xf32> to vector<64x128xf32>
    %6 = arith.mulf %4, %5 : vector<64x128xf32>
    %c0_3 = arith.constant 0 : index
    %c0_4 = arith.constant 0 : index
    %7 = vector.load %arg3[%c0_3, %c0_4] : memref<1x128xf32, #tpu.memory_space<vmem>>, vector<1x128xf32>
    %8 = vector.broadcast %7 : vector<1x128xf32> to vector<64x128xf32>
    %9 = arith.addf %6, %8 : vector<64x128xf32>
    %10 = vector.extract_strided_slice %0 {offsets = [0, 1], sizes = [64, 1], strides = [1, 1]} : vector<64x6xf32> to vector<64x1xf32>
    %11 = vector.extract_strided_slice %1 {offsets = [1, 0], sizes = [1, 128], strides = [1, 1]} : vector<6x128xf32> to vector<1x128xf32>
    %12 = vector.broadcast %10 : vector<64x1xf32> to vector<64x128xf32>
    %13 = vector.broadcast %11 : vector<1x128xf32> to vector<64x128xf32>
    %14 = arith.mulf %12, %13 : vector<64x128xf32>
    %15 = arith.addf %9, %14 : vector<64x128xf32>
    %16 = vector.extract_strided_slice %0 {offsets = [0, 2], sizes = [64, 1], strides = [1, 1]} : vector<64x6xf32> to vector<64x1xf32>
    %17 = vector.extract_strided_slice %1 {offsets = [2, 0], sizes = [1, 128], strides = [1, 1]} : vector<6x128xf32> to vector<1x128xf32>
    %18 = vector.broadcast %16 : vector<64x1xf32> to vector<64x128xf32>
    %19 = vector.broadcast %17 : vector<1x128xf32> to vector<64x128xf32>
    %20 = arith.mulf %18, %19 : vector<64x128xf32>
    %21 = arith.addf %15, %20 : vector<64x128xf32>
    %22 = vector.extract_strided_slice %0 {offsets = [0, 3], sizes = [64, 1], strides = [1, 1]} : vector<64x6xf32> to vector<64x1xf32>
    %23 = vector.extract_strided_slice %1 {offsets = [3, 0], sizes = [1, 128], strides = [1, 1]} : vector<6x128xf32> to vector<1x128xf32>
    %24 = vector.broadcast %22 : vector<64x1xf32> to vector<64x128xf32>
    %25 = vector.broadcast %23 : vector<1x128xf32> to vector<64x128xf32>
    %26 = arith.mulf %24, %25 : vector<64x128xf32>
    %27 = arith.addf %21, %26 : vector<64x128xf32>
    %28 = vector.extract_strided_slice %0 {offsets = [0, 4], sizes = [64, 1], strides = [1, 1]} : vector<64x6xf32> to vector<64x1xf32>
    %29 = vector.extract_strided_slice %1 {offsets = [4, 0], sizes = [1, 128], strides = [1, 1]} : vector<6x128xf32> to vector<1x128xf32>
    %30 = vector.broadcast %28 : vector<64x1xf32> to vector<64x128xf32>
    %31 = vector.broadcast %29 : vector<1x128xf32> to vector<64x128xf32>
    %32 = arith.mulf %30, %31 : vector<64x128xf32>
    %33 = arith.addf %27, %32 : vector<64x128xf32>
    %34 = vector.extract_strided_slice %0 {offsets = [0, 5], sizes = [64, 1], strides = [1, 1]} : vector<64x6xf32> to vector<64x1xf32>
    %35 = vector.extract_strided_slice %1 {offsets = [5, 0], sizes = [1, 128], strides = [1, 1]} : vector<6x128xf32> to vector<1x128xf32>
    %36 = vector.broadcast %34 : vector<64x1xf32> to vector<64x128xf32>
    %37 = vector.broadcast %35 : vector<1x128xf32> to vector<64x128xf32>
    %38 = arith.mulf %36, %37 : vector<64x128xf32>
    %39 = arith.addf %33, %38 : vector<64x128xf32>
    %c0_5 = arith.constant 0 : index
    %c0_6 = arith.constant 0 : index
    %40 = vector.load %arg4[%c0_5, %c0_6] : memref<64x128xf32, #tpu.memory_space<vmem>>, vector<64x128xf32>
    tpu.vector_store %arg4[%c0_5, %c0_6], %39 {strides = array<i32>} : memref<64x128xf32, #tpu.memory_space<vmem>>, vector<64x128xf32>,
    return
  }
  func.func @transform_0(%arg0: i32) -> (i32, i32) {
    %c0_i32 = arith.constant 0 : i32
    %c0_i32_0 = arith.constant 0 : i32
    return %arg0, %c0_i32 : i32, i32
  }
  func.func @transform_1(%arg0: i32) -> (i32, i32) {
    %c0_i32 = arith.constant 0 : i32
    %c0_i32_0 = arith.constant 0 : i32
    %c0_i32_1 = arith.constant 0 : i32
    return %c0_i32, %c0_i32_0 : i32, i32
  }
  func.func @transform_2(%arg0: i32) -> (i32, i32) {
    %c0_i32 = arith.constant 0 : i32
    %c0_i32_0 = arith.constant 0 : i32
    %c0_i32_1 = arith.constant 0 : i32
    return %c0_i32, %c0_i32_0 : i32, i32
  }
  func.func @transform_3(%arg0: i32) -> (i32, i32) {
    %c0_i32 = arith.constant 0 : i32
    %c0_i32_0 = arith.constant 0 : i32
    return %arg0, %c0_i32 : i32, i32
  }
}

</mosaic_0001>

<llo_original>
// kernel: tpu_custom_call.1
$region0: #{tpu_custom_call.1}
  #allocation0 [shape = 'u32[]', space=smem, size = 0x4, offset = 0x4, fixed_abs, tag = 'smem constant byte address 0x4 - core index']
  #allocation1 [shape = 'u32[144,128]{1,0:T(1,128)}', space=vmem, size = 0x12000, scoped, tag = 'internal scratch']
  %s0 = inlined_call_operand.vmem [shape: f32[128,6], index: 0, kind: input, shape index: {}]
  %s1 = inlined_call_operand.vmem [shape: f32[6,128], index: 1, kind: input, shape index: {}]
  %s2 = inlined_call_operand.vmem [shape: f32[1,128], index: 2, kind: input, shape index: {}]
  %s3 = inlined_call_operand.hbm [shape: f32[128,128], index: 3, kind: output, shape index: {}]
  %s4 = sld [smem:[#allocation0]]
  $region45: #{tpu_custom_call.1} parent=0
    _
  %s6 = ssub.s32 1, %s4
  %s7 = scalar_select 0, %s6, %s4
  $region1: #{tpu_custom_call.1} parent=0
    #allocation2 [shape = 'u8[65536]{0}', space=vmem, size = 0x10000, scoped, tag = 'output window, operand 0']
    #allocation3 [shape = 's32[2]{0}', space=sflag, size = 0x8, scoped, tag = 'scoped memory for tpu_custom_call.1']
    %8 = vsyncpa [#allocation3], 0
    %s9 = scalar_lea.sflag [#allocation3], 1
    %10 = vsyncpa %s9, 0
    loop: start=0, step=1, limit=4
    $region2: #{tpu_custom_call.1} parent=1 // loop_pre_header
      _
    $region3: #{tpu_custom_call.1} parent=1 // loop_header
      %s12 = sphi 0, %s16
      %p13 = scmp.ge.s32.totalorder %s12, 4
      %s22 = sphi 0, %s24
      %s25 = sphi 0, %s22
      %s26 = sphi 0, %s25
      %s42 = sphi 0, %s26
      %s46 = sphi 0, %s46
      %s48 = sphi 0, %s46
      %s49 = sphi 0, %s48
      %s63 = sphi 0, %s49
      %s67 = sphi 0, %s67
      %s69 = sphi 0, %s67
      %s70 = sphi 0, %s69
      %s84 = sphi 0, %s70
      %s90 = sphi 0, %s92
      %s93 = sphi 0, %s90
      %s94 = sphi 0, %s93
      %s110 = sphi 0, %s94
    $region4: #{tpu_custom_call.1} parent=1 // loop_header_branch
      %15 = sbr.rel (%p13) target = $region8
    $region5: #{tpu_custom_call.1} parent=1 // loop_body
      %s17 = ssub.s32 %s12, 1
      %s18 = ssub.s32 %s12, 2
      %s19 = sadd.s32 %s12, 1
      %s20 = ssub.s32 %s12, %s19
      %p21 = scmp.eq.s32.totalorder %s20, 0
      %s23 = sadd.s32 %s22, 1
      %s24 = scalar_select %p21, %s22, %s23
      %p27 = pneg %p21
      %p28 = scmp.eq.s32.totalorder %s12, 1
      %p29 = por %p27, %p28
      %p30 = scmp.ne.s32.totalorder %s22, %s25
      %p31 = scmp.eq.s32.totalorder %s12, 0
      %p32 = por %p30, %p31
      %p33 = scmp.ne.s32.totalorder %s22, %s25
      %p34 = scmp.eq.s32.totalorder %s17, 1
      %p35 = por %p33, %p34
      %p36 = scmp.ne.s32.totalorder %s25, %s26
      %p37 = scmp.eq.s32.totalorder %s17, 0
      %p38 = por %p36, %p37
      %p39 = scmp.ne.s32.totalorder %s25, %s26
      %p40 = scmp.eq.s32.totalorder %s18, 1
      %p41 = por %p39, %p40
      %p43 = scmp.ne.s32.totalorder %s26, %s42
      %p44 = scmp.eq.s32.totalorder %s18, 0
      %p45 = por %p43, %p44
      %s47 = sadd.s32 %s46, 1
      %p50 = scmp.eq.s32.totalorder %s12, 1
      %p51 = scmp.ne.s32.totalorder %s46, %s48
      %p52 = scmp.eq.s32.totalorder %s12, 0
      %p53 = por %p51, %p52
      %p54 = scmp.ne.s32.totalorder %s46, %s48
      %p55 = scmp.eq.s32.totalorder %s17, 1
      %p56 = por %p54, %p55
      %p57 = scmp.ne.s32.totalorder %s48, %s49
      %p58 = scmp.eq.s32.totalorder %s17, 0
      %p59 = por %p57, %p58
      %p60 = scmp.ne.s32.totalorder %s48, %s49
      %p61 = scmp.eq.s32.totalorder %s18, 1
      %p62 = por %p60, %p61
      %p64 = scmp.ne.s32.totalorder %s49, %s63
      %p65 = scmp.eq.s32.totalorder %s18, 0
      %p66 = por %p64, %p65
      %s68 = sadd.s32 %s67, 1
      %p71 = scmp.eq.s32.totalorder %s12, 1
      %p72 = scmp.ne.s32.totalorder %s67, %s69
      %p73 = scmp.eq.s32.totalorder %s12, 0
      %p74 = por %p72, %p73
      %p75 = scmp.ne.s32.totalorder %s67, %s69
      %p76 = scmp.eq.s32.totalorder %s17, 1
      %p77 = por %p75, %p76
      %p78 = scmp.ne.s32.totalorder %s69, %s70
      %p79 = scmp.eq.s32.totalorder %s17, 0
      %p80 = por %p78, %p79
      %p81 = scmp.ne.s32.totalorder %s69, %s70
      %p82 = scmp.eq.s32.totalorder %s18, 1
      %p83 = por %p81, %p82
      %p85 = scmp.ne.s32.totalorder %s70, %s84
      %p86 = scmp.eq.s32.totalorder %s18, 0
      %p87 = por %p85, %p86
      %s88 = ssub.s32 %s12, %s19
      %p89 = scmp.eq.s32.totalorder %s88, 0
      %s91 = sadd.s32 %s90, 1
      %s92 = scalar_select %p89, %s90, %s91
      %p95 = pneg %p89
      %p96 = scmp.eq.s32.totalorder %s12, 1
      %p97 = por %p95, %p96
      %p98 = scmp.ne.s32.totalorder %s90, %s93
      %p99 = scmp.eq.s32.totalorder %s12, 0
      %p100 = por %p98, %p99
      %p101 = scmp.ne.s32.totalorder %s90, %s93
      %p102 = scmp.eq.s32.totalorder %s17, 1
      %p103 = por %p101, %p102
      %p104 = scmp.ne.s32.totalorder %s93, %s94
      %p105 = scmp.eq.s32.totalorder %s17, 0
      %p106 = por %p104, %p105
      %p107 = scmp.ne.s32.totalorder %s93, %s94
      %p108 = scmp.eq.s32.totalorder %s18, 1
      %p109 = por %p107, %p108
      %p111 = scmp.ne.s32.totalorder %s94, %s110
      %p112 = scmp.eq.s32.totalorder %s18, 0
      %p113 = por %p111, %p112
      %p114 = scmp.le.s32.totalorder 1, %s12
      %p115 = scmp.lt.s32.totalorder %s12, 3
      %p116 = pnand %p114, %p115
      %p117 = pneg %p116
      // Predicated region
      $region9: #{tpu_custom_call.1} parent=5 // pred_check
        _
      $region10: #{tpu_custom_call.1} parent=5 // pred_check_branch
        %119 = sbr.rel (%p116) target = $region12
      $region11: #{tpu_custom_call.1} parent=5 // pred_region
        %s120 = ssub.s32 %s12, 1
        // Predicated region
        $region13: #{tpu_custom_call.1} parent=11 // pred_check
          %p121 = pneg %p59
        $region14: #{tpu_custom_call.1} parent=11 // pred_check_branch
          %123 = sbr.rel (%p121) target = $region16
        $region15: #{tpu_custom_call.1} parent=11 // pred_region
          _
        $region16: #{tpu_custom_call.1} parent=11 // pred_fallthru
          _
        // Predicated region
        $region17: #{tpu_custom_call.1} parent=11 // pred_check
          %p124 = pneg %p80
        $region18: #{tpu_custom_call.1} parent=11 // pred_check_branch
          %126 = sbr.rel (%p124) target = $region20
        $region19: #{tpu_custom_call.1} parent=11 // pred_region
          _
        $region20: #{tpu_custom_call.1} parent=11 // pred_fallthru
          _
      $region12: #{tpu_custom_call.1} parent=5 // pred_fallthru
        _
      %p127 = scmp.lt.s32.totalorder %s12, 2
      // Predicated region
      $region21: #{tpu_custom_call.1} parent=5 // pred_check
        %p128 = pneg %p127
      $region22: #{tpu_custom_call.1} parent=5 // pred_check_branch
        %130 = sbr.rel (%p128) target = $region24
      $region23: #{tpu_custom_call.1} parent=5 // pred_region
        // Predicated region
        $region25: #{tpu_custom_call.1} parent=23 // pred_check
          %p131 = pneg %p32
        $region26: #{tpu_custom_call.1} parent=23 // pred_check_branch
          %133 = sbr.rel (%p131) target = $region28
        $region27: #{tpu_custom_call.1} parent=23 // pred_region
          %s134 = smul.u32 8, %s12
          %p135 = scmp.lt.s32.totalorder %s134, 15
          %s136 = scalar_select %p135, %s134, 15
          %s137 = smul.addr %s136, 8
          %s138 = scalar_lea.vmem %s0, %s137
          %s139 = smul.u32 8, %s12
        $region28: #{tpu_custom_call.1} parent=23 // pred_fallthru
          _
      $region24: #{tpu_custom_call.1} parent=5 // pred_fallthru
        _
      %p140 = scmp.le.s32.totalorder 1, %s12
      %p141 = scmp.lt.s32.totalorder %s12, 3
      %p142 = pnand %p140, %p141
      %p143 = pneg %p142
      // Predicated region
      $region29: #{tpu_custom_call.1} parent=5 // pred_check
        _
      $region30: #{tpu_custom_call.1} parent=5 // pred_check_branch
        %145 = sbr.rel (%p142) target = $region32
      $region31: #{tpu_custom_call.1} parent=5 // pred_region
        %s146 = ssub.s32 %s12, 1
        %s147 = smul.u32 8, %s17
        %p148 = scmp.lt.s32.totalorder %s147, 15
        %s149 = scalar_select %p148, %s147, 15
        %s150 = smul.addr %s149, 8
        %s151 = scalar_lea.vmem %s0, %s150
        %p152 = pneg %p38
        %p153 = pneg %p35
        %p154 = pneg %p59
        %p155 = pneg %p56
        %p156 = pneg %p80
        %p157 = pneg %p77
        %p158 = pneg %p106
        %p159 = pneg %p103
        %s160 = sand.u32 %s93, 1
        %s161 = scalar_lea.sflag [#allocation3], %s160
        %s162 = sand.u32 %s93, 1
        %s163 = smul.addr %s162, 64
        %s164 = scalar_lea.vmem [#allocation2], %s163
        %s165 = smul.u32 8, %s17
        %p166 = scmp.lt.s32.totalorder %s165, 15
        %s167 = scalar_select %p166, %s165, 15
        %s168 = smul.addr %s167, 8
        %s169 = scalar_lea.vmem %s0, %s168
        %s170 = smul.u32 8, %s17
        %s171 = smul.u32 8, %s17
        %v172 = vld [vmem:[%s169] sm:$0xff]
        %v173 = vld [vmem:[%s169 + $0x8] sm:$0xff]
        %v174 = vld [vmem:[%s169 + $0x10] sm:$0xff]
        %v175 = vld [vmem:[%s169 + $0x18] sm:$0xff]
        %v176 = vld [vmem:[%s169 + $0x20] sm:$0xff]
        %v177 = vld [vmem:[%s169 + $0x28] sm:$0xff]
        %v178 = vld [vmem:[%s169 + $0x30] sm:$0xff]
        %v179 = vld [vmem:[%s169 + $0x38] sm:$0xff]
        %v180 = vld [vmem:[%s1] sm:$0x3f]
        %182 = vset.pattern.permute.xlu0 0
        %183 = vperm.xlu0 %182, %v172
        %v184 = vpop.permute.xlu0 %183
        %187 = vset.pattern.permute.xlu0 0
        %188 = vperm.xlu0 %187, %v173
        %v189 = vpop.permute.xlu0 %188
        %192 = vset.pattern.permute.xlu0 0
        %193 = vperm.xlu0 %192, %v174
        %v194 = vpop.permute.xlu0 %193
        %197 = vset.pattern.permute.xlu0 0
        %198 = vperm.xlu0 %197, %v175
        %v199 = vpop.permute.xlu0 %198
        %202 = vset.pattern.permute.xlu0 0
        %203 = vperm.xlu0 %202, %v176
        %v204 = vpop.permute.xlu0 %203
        %207 = vset.pattern.permute.xlu0 0
        %208 = vperm.xlu0 %207, %v177
        %v209 = vpop.permute.xlu0 %208
        %212 = vset.pattern.permute.xlu0 0
        %213 = vperm.xlu0 %212, %v178
        %v214 = vpop.permute.xlu0 %213
        %217 = vset.pattern.permute.xlu0 0
        %218 = vperm.xlu0 %217, %v179
        %v219 = vpop.permute.xlu0 %218
        %v221 = vlaneseq
        %v222 = vshrl.u32 %v221, 7
        %v223 = vsub.s32 0, %v222
        %v224 = vrot.slane %v180, %v223
        %v225 = vmul.f32 %v184, %v224
        %v226 = vmul.f32 %v189, %v224
        %v227 = vmul.f32 %v194, %v224
        %v228 = vmul.f32 %v199, %v224
        %v229 = vmul.f32 %v204, %v224
        %v230 = vmul.f32 %v209, %v224
        %v231 = vmul.f32 %v214, %v224
        %v232 = vmul.f32 %v219, %v224
        %v233 = vld [vmem:[%s2] sm:$0x1]
        %v235 = vlaneseq
        %v236 = vshrl.u32 %v235, 7
        %v237 = vsub.s32 0, %v236
        %v238 = vrot.slane %v233, %v237
        %v240 = vadd.f32 %v225, %v238
        %v241 = vadd.f32 %v226, %v238
        %v242 = vadd.f32 %v227, %v238
        %v243 = vadd.f32 %v228, %v238
        %v244 = vadd.f32 %v229, %v238
        %v245 = vadd.f32 %v230, %v238
        %v246 = vadd.f32 %v231, %v238
        %v247 = vadd.f32 %v232, %v238
        %248 = vset.pattern.permute.xlu0 1
        %249 = vperm.xlu0 %248, %v172
        %v250 = vpop.permute.xlu0 %249
        %252 = vset.pattern.permute.xlu0 1
        %253 = vperm.xlu0 %252, %v173
        %v254 = vpop.permute.xlu0 %253
        %256 = vset.pattern.permute.xlu0 1
        %257 = vperm.xlu0 %256, %v174
        %v258 = vpop.permute.xlu0 %257
        %260 = vset.pattern.permute.xlu0 1
        %261 = vperm.xlu0 %260, %v175
        %v262 = vpop.permute.xlu0 %261
        %264 = vset.pattern.permute.xlu0 1
        %265 = vperm.xlu0 %264, %v176
        %v266 = vpop.permute.xlu0 %265
        %268 = vset.pattern.permute.xlu0 1
        %269 = vperm.xlu0 %268, %v177
        %v270 = vpop.permute.xlu0 %269
        %272 = vset.pattern.permute.xlu0 1
        %273 = vperm.xlu0 %272, %v178
        %v274 = vpop.permute.xlu0 %273
        %276 = vset.pattern.permute.xlu0 1
        %277 = vperm.xlu0 %276, %v179
        %v278 = vpop.permute.xlu0 %277
        %v280 = vlaneseq
        %v281 = vshrl.u32 %v280, 7
        %v282 = vsub.s32 1, %v281
        %v283 = vrot.slane %v180, %v282
        %v284 = vmul.f32 %v250, %v283
        %v285 = vmul.f32 %v254, %v283
        %v286 = vmul.f32 %v258, %v283
        %v287 = vmul.f32 %v262, %v283
        %v288 = vmul.f32 %v266, %v283
        %v289 = vmul.f32 %v270, %v283
        %v290 = vmul.f32 %v274, %v283
        %v291 = vmul.f32 %v278, %v283
        %v292 = vadd.f32 %v240, %v284
        %v293 = vadd.f32 %v241, %v285
        %v294 = vadd.f32 %v242, %v286
        %v295 = vadd.f32 %v243, %v287
        %v296 = vadd.f32 %v244, %v288
        %v297 = vadd.f32 %v245, %v289
        %v298 = vadd.f32 %v246, %v290
        %v299 = vadd.f32 %v247, %v291
        %300 = vset.pattern.permute.xlu0 2
        %301 = vperm.xlu0 %300, %v172
        %v302 = vpop.permute.xlu0 %301
        %304 = vset.pattern.permute.xlu0 2
        %305 = vperm.xlu0 %304, %v173
        %v306 = vpop.permute.xlu0 %305
        %308 = vset.pattern.permute.xlu0 2
        %309 = vperm.xlu0 %308, %v174
        %v310 = vpop.permute.xlu0 %309
        %312 = vset.pattern.permute.xlu0 2
        %313 = vperm.xlu0 %312, %v175
        %v314 = vpop.permute.xlu0 %313
        %316 = vset.pattern.permute.xlu0 2
        %317 = vperm.xlu0 %316, %v176
        %v318 = vpop.permute.xlu0 %317
        %320 = vset.pattern.permute.xlu0 2
        %321 = vperm.xlu0 %320, %v177
        %v322 = vpop.permute.xlu0 %321
        %324 = vset.pattern.permute.xlu0 2
        %325 = vperm.xlu0 %324, %v178
        %v326 = vpop.permute.xlu0 %325
        %328 = vset.pattern.permute.xlu0 2
        %329 = vperm.xlu0 %328, %v179
        %v330 = vpop.permute.xlu0 %329
        %v332 = vlaneseq
        %v333 = vshrl.u32 %v332, 7
        %v334 = vsub.s32 2, %v333
        %v335 = vrot.slane %v180, %v334
        %v336 = vmul.f32 %v302, %v335
        %v337 = vmul.f32 %v306, %v335
        %v338 = vmul.f32 %v310, %v335
        %v339 = vmul.f32 %v314, %v335
        %v340 = vmul.f32 %v318, %v335
        %v341 = vmul.f32 %v322, %v335
        %v342 = vmul.f32 %v326, %v335
        %v343 = vmul.f32 %v330, %v335
        %v344 = vadd.f32 %v292, %v336
        %v345 = vadd.f32 %v293, %v337
        %v346 = vadd.f32 %v294, %v338
        %v347 = vadd.f32 %v295, %v339
        %v348 = vadd.f32 %v296, %v340
        %v349 = vadd.f32 %v297, %v341
        %v350 = vadd.f32 %v298, %v342
        %v351 = vadd.f32 %v299, %v343
        %352 = vset.pattern.permute.xlu0 3
        %353 = vperm.xlu0 %352, %v172
        %v354 = vpop.permute.xlu0 %353
        %356 = vset.pattern.permute.xlu0 3
        %357 = vperm.xlu0 %356, %v173
        %v358 = vpop.permute.xlu0 %357
        %360 = vset.pattern.permute.xlu0 3
        %361 = vperm.xlu0 %360, %v174
        %v362 = vpop.permute.xlu0 %361
        %364 = vset.pattern.permute.xlu0 3
        %365 = vperm.xlu0 %364, %v175
        %v366 = vpop.permute.xlu0 %365
        %368 = vset.pattern.permute.xlu0 3
        %369 = vperm.xlu0 %368, %v176
        %v370 = vpop.permute.xlu0 %369
        %372 = vset.pattern.permute.xlu0 3
        %373 = vperm.xlu0 %372, %v177
        %v374 = vpop.permute.xlu0 %373
        %376 = vset.pattern.permute.xlu0 3
        %377 = vperm.xlu0 %376, %v178
        %v378 = vpop.permute.xlu0 %377
        %380 = vset.pattern.permute.xlu0 3
        %381 = vperm.xlu0 %380, %v179
        %v382 = vpop.permute.xlu0 %381
        %v384 = vlaneseq
        %v385 = vshrl.u32 %v384, 7
        %v386 = vsub.s32 3, %v385
        %v387 = vrot.slane %v180, %v386
        %v388 = vmul.f32 %v354, %v387
        %v389 = vmul.f32 %v358, %v387
        %v390 = vmul.f32 %v362, %v387
        %v391 = vmul.f32 %v366, %v387
        %v392 = vmul.f32 %v370, %v387
        %v393 = vmul.f32 %v374, %v387
        %v394 = vmul.f32 %v378, %v387
        %v395 = vmul.f32 %v382, %v387
        %v396 = vadd.f32 %v344, %v388
        %v397 = vadd.f32 %v345, %v389
        %v398 = vadd.f32 %v346, %v390
        %v399 = vadd.f32 %v347, %v391
        %v400 = vadd.f32 %v348, %v392
        %v401 = vadd.f32 %v349, %v393
        %v402 = vadd.f32 %v350, %v394
        %v403 = vadd.f32 %v351, %v395
        %404 = vset.pattern.permute.xlu0 4
        %405 = vperm.xlu0 %404, %v172
        %v406 = vpop.permute.xlu0 %405
        %408 = vset.pattern.permute.xlu0 4
        %409 = vperm.xlu0 %408, %v173
        %v410 = vpop.permute.xlu0 %409
        %412 = vset.pattern.permute.xlu0 4
        %413 = vperm.xlu0 %412, %v174
        %v414 = vpop.permute.xlu0 %413
        %416 = vset.pattern.permute.xlu0 4
        %417 = vperm.xlu0 %416, %v175
        %v418 = vpop.permute.xlu0 %417
        %420 = vset.pattern.permute.xlu0 4
        %421 = vperm.xlu0 %420, %v176
        %v422 = vpop.permute.xlu0 %421
        %424 = vset.pattern.permute.xlu0 4
        %425 = vperm.xlu0 %424, %v177
        %v426 = vpop.permute.xlu0 %425
        %428 = vset.pattern.permute.xlu0 4
        %429 = vperm.xlu0 %428, %v178
        %v430 = vpop.permute.xlu0 %429
        %432 = vset.pattern.permute.xlu0 4
        %433 = vperm.xlu0 %432, %v179
        %v434 = vpop.permute.xlu0 %433
        %v436 = vlaneseq
        %v437 = vshrl.u32 %v436, 7
        %v438 = vsub.s32 4, %v437
        %v439 = vrot.slane %v180, %v438
        %v440 = vmul.f32 %v406, %v439
        %v441 = vmul.f32 %v410, %v439
        %v442 = vmul.f32 %v414, %v439
        %v443 = vmul.f32 %v418, %v439
        %v444 = vmul.f32 %v422, %v439
        %v445 = vmul.f32 %v426, %v439
        %v446 = vmul.f32 %v430, %v439
        %v447 = vmul.f32 %v434, %v439
        %v448 = vadd.f32 %v396, %v440
        %v449 = vadd.f32 %v397, %v441
        %v450 = vadd.f32 %v398, %v442
        %v451 = vadd.f32 %v399, %v443
        %v452 = vadd.f32 %v400, %v444
        %v453 = vadd.f32 %v401, %v445
        %v454 = vadd.f32 %v402, %v446
        %v455 = vadd.f32 %v403, %v447
        %456 = vset.pattern.permute.xlu0 5
        %457 = vperm.xlu0 %456, %v172
        %v458 = vpop.permute.xlu0 %457
        %460 = vset.pattern.permute.xlu0 5
        %461 = vperm.xlu0 %460, %v173
        %v462 = vpop.permute.xlu0 %461
        %464 = vset.pattern.permute.xlu0 5
        %465 = vperm.xlu0 %464, %v174
        %v466 = vpop.permute.xlu0 %465
        %468 = vset.pattern.permute.xlu0 5
        %469 = vperm.xlu0 %468, %v175
        %v470 = vpop.permute.xlu0 %469
        %472 = vset.pattern.permute.xlu0 5
        %473 = vperm.xlu0 %472, %v176
        %v474 = vpop.permute.xlu0 %473
        %476 = vset.pattern.permute.xlu0 5
        %477 = vperm.xlu0 %476, %v177
        %v478 = vpop.permute.xlu0 %477
        %480 = vset.pattern.permute.xlu0 5
        %481 = vperm.xlu0 %480, %v178
        %v482 = vpop.permute.xlu0 %481
        %484 = vset.pattern.permute.xlu0 5
        %485 = vperm.xlu0 %484, %v179
        %v486 = vpop.permute.xlu0 %485
        %v488 = vlaneseq
        %v489 = vshrl.u32 %v488, 7
        %v490 = vsub.s32 5, %v489
        %v491 = vrot.slane %v180, %v490
        %v492 = vmul.f32 %v458, %v491
        %v493 = vmul.f32 %v462, %v491
        %v494 = vmul.f32 %v466, %v491
        %v495 = vmul.f32 %v470, %v491
        %v496 = vmul.f32 %v474, %v491
        %v497 = vmul.f32 %v478, %v491
        %v498 = vmul.f32 %v482, %v491
        %v499 = vmul.f32 %v486, %v491
        %v500 = vadd.f32 %v448, %v492
        %v501 = vadd.f32 %v449, %v493
        %v502 = vadd.f32 %v450, %v494
        %v503 = vadd.f32 %v451, %v495
        %v504 = vadd.f32 %v452, %v496
        %v505 = vadd.f32 %v453, %v497
        %v506 = vadd.f32 %v454, %v498
        %v507 = vadd.f32 %v455, %v499
        %508 = vst [vmem:[%s164] sm:$0xff] %v500
        %509 = vst [vmem:[%s164 + $0x8] sm:$0xff] %v501
        %510 = vst [vmem:[%s164 + $0x10] sm:$0xff] %v502
        %511 = vst [vmem:[%s164 + $0x18] sm:$0xff] %v503
        %512 = vst [vmem:[%s164 + $0x20] sm:$0xff] %v504
        %513 = vst [vmem:[%s164 + $0x28] sm:$0xff] %v505
        %514 = vst [vmem:[%s164 + $0x30] sm:$0xff] %v506
        %515 = vst [vmem:[%s164 + $0x38] sm:$0xff] %v507
        %s516 = sand.u32 %s93, 1
        %s517 = scalar_lea.sflag [#allocation3], %s516
        %s518 = sand.u32 %s93, 1
        %s519 = smul.addr %s518, 64
        %s520 = scalar_lea.vmem [#allocation2], %s519
        // Predicated region
        $region33: #{tpu_custom_call.1} parent=31 // pred_check
          %p521 = pneg %p103
        $region34: #{tpu_custom_call.1} parent=31 // pred_check_branch
          %523 = sbr.rel (%p521) target = $region36
        $region35: #{tpu_custom_call.1} parent=31 // pred_region
          %s524 = smul.u32 8, %s17
          %s526 = ssub.s32 1024, 1024
          %527 = vsyncadd %s517, %s526
          %s528 = smul.addr %s524, 128
          %s529 = scalar_lea.hbm %s3, %s528
          %s530 = sshll.u32 %s520, 4
          %s531 = int_to_ptr.vmem [resolvable:$true] %s530
          %536 = dma.vmem_to_hbm [thread:$0]  %s531, 1024, %s529, %s517, 128, 128, 8
        $region36: #{tpu_custom_call.1} parent=31 // pred_fallthru
          _
      $region32: #{tpu_custom_call.1} parent=5 // pred_fallthru
        _
      %p537 = scmp.le.s32.totalorder 2, %s12
      // Predicated region
      $region37: #{tpu_custom_call.1} parent=5 // pred_check
        %p538 = pneg %p537
      $region38: #{tpu_custom_call.1} parent=5 // pred_check_branch
        %540 = sbr.rel (%p538) target = $region40
      $region39: #{tpu_custom_call.1} parent=5 // pred_region
        %s541 = ssub.s32 %s12, 2
        // Predicated region
        $region41: #{tpu_custom_call.1} parent=39 // pred_check
          %p542 = pneg %p109
        $region42: #{tpu_custom_call.1} parent=39 // pred_check_branch
          %544 = sbr.rel (%p542) target = $region44
        $region43: #{tpu_custom_call.1} parent=39 // pred_region
          %s545 = sand.u32 %s94, 1
          %s546 = scalar_lea.sflag [#allocation3], %s545
          %s547 = sand.u32 %s94, 1
          %s548 = smul.addr %s547, 64
          %s549 = scalar_lea.vmem [#allocation2], %s548
          %550 = dma.done %s546, 1024
        $region44: #{tpu_custom_call.1} parent=39 // pred_fallthru
          _
      $region40: #{tpu_custom_call.1} parent=5 // pred_fallthru
        _
    $region6: #{tpu_custom_call.1} parent=1 // loop_footer
      %s16 = sadd.s32 1, %s12
    $region7: #{tpu_custom_call.1} parent=1 // loop_footer_branch
      %11 = sbr.rel target = $region3
    $region8: #{tpu_custom_call.1} parent=1 // loop_exit
      _
    %551 = vsyncpa [#allocation3], 1
    %s552 = scalar_lea.sflag [#allocation3], 1
    %553 = vsyncpa %s552, 1

</llo_original>
